<compile_context>
chip_gen: v5e
topology: v5e:2x2
jax: 0.10.0
libtpu: 0.0.40
codegen_flags: <defaults>
</compile_context>

<pallas_src>
import functools
import math

import jax
import jax.numpy as jnp
from jax.experimental import pallas as pl
from jax.experimental.pallas import tpu as pltpu


# ---------------------------------------------------------------------------
# Pallas kernel: whole forward pass in one invocation, everything in VMEM.
# ---------------------------------------------------------------------------
def _policy_kernel(x_ref, eps_ref, w1_ref, wht_ref, bias_ref,
                   action_ref, logprob_ref, *, action_bound, S, A, H):
    x = x_ref[...]                   # [B, S]
    eps = eps_ref[...]               # [B, A]
    w1 = w1_ref[...]                 # [S, H]
    wt = wht_ref[...]                # [2A, H]  (lane-dense transposed heads)
    bias = bias_ref[...]             # [3, H]   rows: b1 | bmu(pad) | bstd(pad)

    b1 = bias[0:1, :]                # [1, H]
    bmu = bias[1:2, 0:A]             # [1, A]   lane-aligned at offset 0
    bstd = bias[2:3, 0:A]            # [1, A]   lane-aligned at offset 0

    # fc1 + relu on the VPU: K = S is tiny, unrolled broadcast MACs beat a
    # near-empty MXU matmul.
    h = x[:, 0:1] * w1[0:1, :]
    for s in range(1, S):
        h = h + x[:, s:s + 1] * w1[s:s + 1, :]
    h = jnp.maximum(h + b1, 0.0)     # [B, H]

    # mu / pre-std heads as VPU multiplies + XLU lane reductions (exact f32).
    def head_col(j):
        return jnp.sum(h * wt[j:j + 1, :], axis=-1, keepdims=True)   # [B, 1]

    if A == 1:
        mu = head_col(0) + bmu
        pre = head_col(1) + bstd
    else:
        mu = jnp.concatenate([head_col(j) for j in range(A)], axis=1) + bmu
        pre = jnp.concatenate([head_col(A + j) for j in range(A)], axis=1) + bstd

    # softplus, numerically stable (matches F.softplus)
    std = jnp.maximum(pre, 0.0) + jnp.log1p(jnp.exp(-jnp.abs(pre)))

    # rsample; note (ns - mu)/std == eps exactly, so Normal.log_prob simplifies.
    ns = mu + std * eps
    action = jnp.tanh(ns)

    # Fused-log tail; double tanh kept on purpose to match the PyTorch forward.
    log_prob = (-0.5 * eps * eps
                - 0.5 * math.log(2.0 * math.pi)
                - jnp.log(std * (1.0 - jnp.tanh(action) ** 2 + 1e-7)))

    action_ref[...] = (action * action_bound).astype(action_ref.dtype)
    logprob_ref[...] = log_prob.astype(logprob_ref.dtype)


# ---------------------------------------------------------------------------
# Parameter packing (done once, outside the per-step call).
# ---------------------------------------------------------------------------
def pack_params(params):
    w1, b1, wmu, bmu, wstd, bstd = params
    H = w1.shape[1]
    A = wmu.shape[1]
    # Head weights stored transposed -> [2A, H], lane-dense (last dim = H).
    w_heads_t = jnp.concatenate([wmu.T, wstd.T], axis=0)          # [2A, H]
    # Biases as a [3, H] stack so every kernel slice is lane-aligned at 0.
    pad = H - A
    bias = jnp.stack([
        b1[0],
        jnp.pad(bmu[0], (0, pad)),
        jnp.pad(bstd[0], (0, pad)),
    ], axis=0)                                                     # [3, H]
    return w1, w_heads_t, bias


def policy_net_continuous_forward(x, eps, packed_params, action_bound):
    """x: [B, state_dim] f32, eps: [B, action_dim] f32 (N(0,1) noise)."""
    w1, w_heads_t, bias = packed_params
    B, S = x.shape
    H = w1.shape[1]
    A = w_heads_t.shape[0] // 2
    assert eps.shape == (B, A)

    kernel = functools.partial(
        _policy_kernel, action_bound=float(action_bound), S=S, A=A, H=H)

    vmem = pl.BlockSpec(memory_space=pltpu.MemorySpace.VMEM)
    action, log_prob = pl.pallas_call(
        kernel,
        out_shape=(jax.ShapeDtypeStruct((B, A), jnp.float32),
                   jax.ShapeDtypeStruct((B, A), jnp.float32)),
        in_specs=[vmem, vmem, vmem, vmem, vmem],
        out_specs=(vmem, vmem),
    )(x, eps, w1, w_heads_t, bias)
    return action, log_prob


# ---------------------------------------------------------------------------
# Deterministic parameter init (PyTorch Linear-style uniform bounds).
# Weights are stored transposed vs. PyTorch: W is [in_features, out_features].
# ---------------------------------------------------------------------------
def init_params(key, state_dim, hidden_dim, action_dim):
    ks = jax.random.split(key, 6)

    def linear(kw, kb, fan_in, fan_out):
        bound = 1.0 / math.sqrt(fan_in)
        w = jax.random.uniform(kw, (fan_in, fan_out), jnp.float32, -bound, bound)
        b = jax.random.uniform(kb, (1, fan_out), jnp.float32, -bound, bound)
        return w, b

    w1, b1 = linear(ks[0], ks[1], state_dim, hidden_dim)
    wmu, bmu = linear(ks[2], ks[3], hidden_dim, action_dim)
    wstd, bstd = linear(ks[4], ks[5], hidden_dim, action_dim)
    return (w1, b1, wmu, bmu, wstd, bstd)


# ---------------------------------------------------------------------------
# Pure-JAX reference (mirrors the PyTorch forward exactly; HIGHEST precision
# matmuls so the f32 reference is comparable with the exact-f32 VPU kernel).
# ---------------------------------------------------------------------------
def _ref_forward(x, eps, params, action_bound):
    w1, b1, wmu, bmu, wstd, bstd = params
    hi = jax.lax.Precision.HIGHEST
    h = jax.nn.relu(jnp.dot(x, w1, precision=hi) + b1)
    mu = jnp.dot(h, wmu, precision=hi) + bmu
    std = jax.nn.softplus(jnp.dot(h, wstd, precision=hi) + bstd)
    ns = mu + std * eps
    log_prob = (-0.5 * ((ns - mu) / std) ** 2 - jnp.log(std)
                - 0.5 * math.log(2.0 * math.pi))
    action = jnp.tanh(ns)
    log_prob = log_prob - jnp.log(1 - jnp.tanh(action) ** 2 + 1e-7)
    action = action * action_bound
    return action, log_prob


if __name__ == "__main__":
    # Pendulum-v1: state_dim=3, action_dim=1, action_bound=2.0, hidden_dim=128
    state_dim, hidden_dim, action_dim = 3, 128, 1
    action_bound = 2.0
    batch = 8

    key = jax.random.PRNGKey(0)
    k_params, k_x, k_eps = jax.random.split(key, 3)

    params = init_params(k_params, state_dim, hidden_dim, action_dim)
    packed = pack_params(params)

    x = jax.random.normal(k_x, (batch, state_dim), jnp.float32)
    # TODO(synk): Normal.rsample's internal RNG has no in-kernel equivalent;
    # the reparameterization noise eps is generated outside and passed in.
    eps = jax.random.normal(k_eps, (batch, action_dim), jnp.float32)

    action, log_prob = policy_net_continuous_forward(x, eps, packed, action_bound)
    jax.block_until_ready((action, log_prob))

    a_ref, lp_ref = _ref_forward(x, eps, params, action_bound)
    assert action.shape == (batch, action_dim)
    assert log_prob.shape == (batch, action_dim)
    assert jnp.allclose(action, a_ref, atol=1e-5, rtol=1e-5)
    assert jnp.allclose(log_prob, lp_ref, atol=1e-4, rtol=1e-4)

    print("KERNEL_OK")
</pallas_src>

<mosaic_0001>
module attributes {stable_mosaic.version = 11 : i64} {
  func.func @_policy_kernel(%arg0: memref<8x3xf32, #tpu.memory_space<vmem>>, %arg1: memref<8x1xf32, #tpu.memory_space<vmem>>, %arg2: memref<3x128xf32, #tpu.memory_space<vmem>>, %arg3: memref<2x128xf32, #tpu.memory_space<vmem>>, %arg4: memref<3x128xf32, #tpu.memory_space<vmem>>, %arg5: memref<8x1xf32, #tpu.memory_space<vmem>>, %arg6: memref<8x1xf32, #tpu.memory_space<vmem>>) attributes {dimension_semantics = [], scalar_prefetch = 0 : i64, scratch_operands = 0 : i64, tpu.core_type = #tpu.core_type<tc>} {
    %c0 = arith.constant 0 : index
    %c0_0 = arith.constant 0 : index
    %0 = vector.load %arg0[%c0, %c0_0] : memref<8x3xf32, #tpu.memory_space<vmem>>, vector<8x3xf32>
    %c0_1 = arith.constant 0 : index
    %c0_2 = arith.constant 0 : index
    %1 = vector.load %arg1[%c0_1, %c0_2] : memref<8x1xf32, #tpu.memory_space<vmem>>, vector<8x1xf32>
    %c0_3 = arith.constant 0 : index
    %c0_4 = arith.constant 0 : index
    %2 = vector.load %arg2[%c0_3, %c0_4] : memref<3x128xf32, #tpu.memory_space<vmem>>, vector<3x128xf32>
    %c0_5 = arith.constant 0 : index
    %c0_6 = arith.constant 0 : index
    %3 = vector.load %arg3[%c0_5, %c0_6] : memref<2x128xf32, #tpu.memory_space<vmem>>, vector<2x128xf32>
    %c0_7 = arith.constant 0 : index
    %c0_8 = arith.constant 0 : index
    %4 = vector.load %arg4[%c0_7, %c0_8] : memref<3x128xf32, #tpu.memory_space<vmem>>, vector<3x128xf32>
    %5 = vector.extract_strided_slice %4 {offsets = [0, 0], sizes = [1, 128], strides = [1, 1]} : vector<3x128xf32> to vector<1x128xf32>
    %6 = vector.extract_strided_slice %4 {offsets = [1, 0], sizes = [1, 1], strides = [1, 1]} : vector<3x128xf32> to vector<1x1xf32>
    %7 = vector.extract_strided_slice %4 {offsets = [2, 0], sizes = [1, 1], strides = [1, 1]} : vector<3x128xf32> to vector<1x1xf32>
    %8 = vector.extract_strided_slice %0 {offsets = [0, 0], sizes = [8, 1], strides = [1, 1]} : vector<8x3xf32> to vector<8x1xf32>
    %9 = vector.extract_strided_slice %2 {offsets = [0, 0], sizes = [1, 128], strides = [1, 1]} : vector<3x128xf32> to vector<1x128xf32>
    %10 = vector.broadcast %8 : vector<8x1xf32> to vector<8x128xf32>
    %11 = vector.broadcast %9 : vector<1x128xf32> to vector<8x128xf32>
    %12 = arith.mulf %10, %11 : vector<8x128xf32>
    %13 = vector.extract_strided_slice %0 {offsets = [0, 1], sizes = [8, 1], strides = [1, 1]} : vector<8x3xf32> to vector<8x1xf32>
    %14 = vector.extract_strided_slice %2 {offsets = [1, 0], sizes = [1, 128], strides = [1, 1]} : vector<3x128xf32> to vector<1x128xf32>
    %15 = vector.broadcast %13 : vector<8x1xf32> to vector<8x128xf32>
    %16 = vector.broadcast %14 : vector<1x128xf32> to vector<8x128xf32>
    %17 = arith.mulf %15, %16 : vector<8x128xf32>
    %18 = arith.addf %12, %17 : vector<8x128xf32>
    %19 = vector.extract_strided_slice %0 {offsets = [0, 2], sizes = [8, 1], strides = [1, 1]} : vector<8x3xf32> to vector<8x1xf32>
    %20 = vector.extract_strided_slice %2 {offsets = [2, 0], sizes = [1, 128], strides = [1, 1]} : vector<3x128xf32> to vector<1x128xf32>
    %21 = vector.broadcast %19 : vector<8x1xf32> to vector<8x128xf32>
    %22 = vector.broadcast %20 : vector<1x128xf32> to vector<8x128xf32>
    %23 = arith.mulf %21, %22 : vector<8x128xf32>
    %24 = arith.addf %18, %23 : vector<8x128xf32>
    %25 = vector.broadcast %5 : vector<1x128xf32> to vector<8x128xf32>
    %26 = arith.addf %24, %25 : vector<8x128xf32>
    %cst = arith.constant 0.000000e+00 : f32
    %27 = vector.broadcast %cst : f32 to vector<8x128xf32>
    %28 = arith.maximumf %26, %27 : vector<8x128xf32>
    %29 = vector.extract_strided_slice %3 {offsets = [0, 0], sizes = [1, 128], strides = [1, 1]} : vector<2x128xf32> to vector<1x128xf32>
    %30 = vector.broadcast %29 : vector<1x128xf32> to vector<8x128xf32>
    %31 = arith.mulf %28, %30 : vector<8x128xf32>
    %cst_9 = arith.constant dense<0.000000e+00> : vector<8xf32>
    %32 = vector.multi_reduction <add>, %31, %cst_9 [1] : vector<8x128xf32> to vector<8xf32>
    %33 = vector.shape_cast %32 : vector<8xf32> to vector<8x1xf32>
    %34 = vector.broadcast %6 : vector<1x1xf32> to vector<8x1xf32>
    %35 = arith.addf %33, %34 : vector<8x1xf32>
    %36 = vector.extract_strided_slice %3 {offsets = [1, 0], sizes = [1, 128], strides = [1, 1]} : vector<2x128xf32> to vector<1x128xf32>
    %37 = vector.broadcast %36 : vector<1x128xf32> to vector<8x128xf32>
    %38 = arith.mulf %28, %37 : vector<8x128xf32>
    %cst_10 = arith.constant dense<0.000000e+00> : vector<8xf32>
    %39 = vector.multi_reduction <add>, %38, %cst_10 [1] : vector<8x128xf32> to vector<8xf32>
    %40 = vector.shape_cast %39 : vector<8xf32> to vector<8x1xf32>
    %41 = vector.broadcast %7 : vector<1x1xf32> to vector<8x1xf32>
    %42 = arith.addf %40, %41 : vector<8x1xf32>
    %cst_11 = arith.constant 0.000000e+00 : f32
    %43 = vector.broadcast %cst_11 : f32 to vector<8x1xf32>
    %44 = arith.maximumf %42, %43 : vector<8x1xf32>
    %45 = math.absf %42 : vector<8x1xf32>
    %cst_12 = arith.constant 0.000000e+00 : f32
    %46 = vector.broadcast %cst_12 : f32 to vector<8x1xf32>
    %47 = arith.subf %46, %45 : vector<8x1xf32>
    %48 = math.exp %47 : vector<8x1xf32>
    %49 = math.log1p %48 : vector<8x1xf32>
    %50 = arith.addf %44, %49 : vector<8x1xf32>
    %51 = arith.mulf %50, %1 : vector<8x1xf32>
    %52 = arith.addf %35, %51 : vector<8x1xf32>
    %53 = math.tanh %52 : vector<8x1xf32>
    %cst_13 = arith.constant -5.000000e-01 : f32
    %54 = vector.broadcast %cst_13 : f32 to vector<8x1xf32>
    %55 = arith.mulf %54, %1 : vector<8x1xf32>
    %56 = arith.mulf %55, %1 : vector<8x1xf32>
    %cst_14 = arith.constant 0.918938517 : f32
    %57 = vector.broadcast %cst_14 : f32 to vector<8x1xf32>
    %58 = arith.subf %56, %57 : vector<8x1xf32>
    %59 = math.tanh %53 : vector<8x1xf32>
    %60 = arith.mulf %59, %59 : vector<8x1xf32>
    %cst_15 = arith.constant 1.000000e+00 : f32
    %61 = vector.broadcast %cst_15 : f32 to vector<8x1xf32>
    %62 = arith.subf %61, %60 : vector<8x1xf32>
    %cst_16 = arith.constant 1.000000e-07 : f32
    %63 = vector.broadcast %cst_16 : f32 to vector<8x1xf32>
    %64 = arith.addf %62, %63 : vector<8x1xf32>
    %65 = arith.mulf %50, %64 : vector<8x1xf32>
    %66 = math.log %65 : vector<8x1xf32>
    %67 = arith.subf %58, %66 : vector<8x1xf32>
    %cst_17 = arith.constant 2.000000e+00 : f32
    %68 = vector.broadcast %cst_17 : f32 to vector<8x1xf32>
    %69 = arith.mulf %53, %68 : vector<8x1xf32>
    %c0_18 = arith.constant 0 : index
    %c0_19 = arith.constant 0 : index
    %70 = vector.load %arg5[%c0_18, %c0_19] : memref<8x1xf32, #tpu.memory_space<vmem>>, vector<8x1xf32>
    tpu.vector_store %arg5[%c0_18, %c0_19], %69 {strides = array<i32>} : memref<8x1xf32, #tpu.memory_space<vmem>>, vector<8x1xf32>,
    %c0_20 = arith.constant 0 : index
    %c0_21 = arith.constant 0 : index
    %71 = vector.load %arg6[%c0_20, %c0_21] : memref<8x1xf32, #tpu.memory_space<vmem>>, vector<8x1xf32>
    tpu.vector_store %arg6[%c0_20, %c0_21], %67 {strides = array<i32>} : memref<8x1xf32, #tpu.memory_space<vmem>>, vector<8x1xf32>,
    return
  }
}

</mosaic_0001>

<llo_original>
// kernel: tpu_custom_call.1
$region0: #{tpu_custom_call.1}
  #allocation0 [shape = 'u32[]', space=smem, size = 0x4, offset = 0x4, fixed_abs, tag = 'smem constant byte address 0x4 - core index']
  #allocation1 [shape = 'u32[72,128]{1,0:T(1,128)}', space=vmem, size = 0x9000, scoped, tag = 'internal scratch']
  %s0 = inlined_call_operand.vmem [shape: f32[8,3], index: 0, kind: input, shape index: {}]
  %s1 = inlined_call_operand.vmem [shape: f32[8,1], index: 1, kind: input, shape index: {}]
  %s2 = inlined_call_operand.vmem [shape: f32[3,128], index: 2, kind: input, shape index: {}]
  %s3 = inlined_call_operand.vmem [shape: f32[2,128], index: 3, kind: input, shape index: {}]
  %s4 = inlined_call_operand.vmem [shape: f32[3,128], index: 4, kind: input, shape index: {}]
  %s5 = inlined_call_operand.vmem [shape: f32[8,1], index: 5, kind: output, shape index: {0}]
  %s6 = inlined_call_operand.vmem [shape: f32[8,1], index: 6, kind: output, shape index: {1}]
  %7 = xla_tuple %s5, %s6
  %s8 = sld [smem:[#allocation0]]
  $region38: #{tpu_custom_call.1} parent=0
    _
  %s10 = ssub.s32 1, %s8
  %s11 = scalar_select 0, %s10, %s8
  // Predicated region
  $region2: #{tpu_custom_call.1} parent=0 // pred_check
    _
  $region3: #{tpu_custom_call.1} parent=0 // pred_check_branch
    %13 = sbr.rel (0) target = $region5
  $region4: #{tpu_custom_call.1} parent=0 // pred_region
    _
  $region5: #{tpu_custom_call.1} parent=0 // pred_fallthru
    _
  // Predicated region
  $region6: #{tpu_custom_call.1} parent=0 // pred_check
    _
  $region7: #{tpu_custom_call.1} parent=0 // pred_check_branch
    %15 = sbr.rel (0) target = $region9
  $region8: #{tpu_custom_call.1} parent=0 // pred_region
    _
  $region9: #{tpu_custom_call.1} parent=0 // pred_fallthru
    _
  // Predicated region
  $region10: #{tpu_custom_call.1} parent=0 // pred_check
    _
  $region11: #{tpu_custom_call.1} parent=0 // pred_check_branch
    %17 = sbr.rel (0) target = $region13
  $region12: #{tpu_custom_call.1} parent=0 // pred_region
    _
  $region13: #{tpu_custom_call.1} parent=0 // pred_fallthru
    _
  // Predicated region
  $region14: #{tpu_custom_call.1} parent=0 // pred_check
    _
  $region15: #{tpu_custom_call.1} parent=0 // pred_check_branch
    %19 = sbr.rel (0) target = $region17
  $region16: #{tpu_custom_call.1} parent=0 // pred_region
    _
  $region17: #{tpu_custom_call.1} parent=0 // pred_fallthru
    _
  // Predicated region
  $region18: #{tpu_custom_call.1} parent=0 // pred_check
    _
  $region19: #{tpu_custom_call.1} parent=0 // pred_check_branch
    %21 = sbr.rel (0) target = $region21
  $region20: #{tpu_custom_call.1} parent=0 // pred_region
    _
  $region21: #{tpu_custom_call.1} parent=0 // pred_fallthru
    _
  %v22 = vld [vmem:[%s0] sm:$0xff]
  %v23 = vld [vmem:[%s1] sm:$0xff]
  %v24 = vld [vmem:[%s2] sm:$0x7]
  %v25 = vld [vmem:[%s3] sm:$0x3]
  %v26 = vld [vmem:[%s4] sm:$0x7]
  %28 = vset.pattern.permute.xlu0 0
  %29 = vperm.xlu0 %28, %v22
  %v30 = vpop.permute.xlu0 %29
  %v32 = vperm.slane %v24, 0
  %v33 = vmul.f32 %v30, %v32
  %34 = vset.pattern.permute.xlu0 1
  %35 = vperm.xlu0 %34, %v22
  %v36 = vpop.permute.xlu0 %35
  %v38 = vperm.slane %v24, 1
  %v39 = vmul.f32 %v36, %v38
  %v40 = vadd.f32 %v33, %v39
  %41 = vset.pattern.permute.xlu0 2
  %42 = vperm.xlu0 %41, %v22
  %v43 = vpop.permute.xlu0 %42
  %v45 = vperm.slane %v24, 2
  %v46 = vmul.f32 %v43, %v45
  %v47 = vadd.f32 %v40, %v46
  %v48 = vperm.slane %v26, 0
  %v49 = vadd.f32 %v47, %v48
  %v50 = vmax.f32 %v49, 0.0
  %v51 = vperm.slane %v25, 0
  %v52 = vmul.f32 %v50, %v51
  %53 = vadd.xlane.f32.xlu0 %v52
  %v54 = vpop.xlane.xlu0 %53
  %v55 = vperm.slane %v26, 1
  %v56 = vadd.f32 %v54, %v55
  %v57 = vperm.slane %v25, 1
  %v58 = vmul.f32 %v50, %v57
  %59 = vadd.xlane.f32.xlu0 %v58
  %v60 = vpop.xlane.xlu0 %59
  %v61 = vperm.slane %v26, 2
  %v62 = vadd.f32 %v60, %v61
  %v63 = vmax.f32 %v62, 0.0
  %v64 = vand.u32 2147483647, %v62
  %v65 = vsub.f32 0.0, %v64
  %v66 = vmul.f32 %v65, 1.442695
  %v67 = vpow.pop %v66
  %v68 = vadd.f32 %v67, 1.0
  %v69 = vlog2.pop %v68
  %v70 = vmul.f32 %v69, 0.6931472
  %v71 = vmul.f32 -0.5, %v67
  %v72 = vadd.f32 %v71, 1.0
  %v73 = vmul.f32 %v72, %v67
  %v74 = vand.u32 2147483647, %v67
  %vm75 = vcmp.lt.f32.partialorder %v74, 0.0004427343
  %v76 = vsel %vm75, %v73, %v70
  %v77 = vadd.f32 %v63, %v76
  %v78 = vmul.f32 %v77, %v23
  %v79 = vadd.f32 %v56, %v78
  %v80 = vtanh.pop %v79
  %v81 = vmul.f32 %v23, -0.5
  %v82 = vmul.f32 %v81, %v23
  %v83 = vsub.f32 %v82, 0.9189385
  %v84 = vtanh.pop %v80
  %v85 = vmul.f32 %v84, %v84
  %v86 = vsub.f32 1.0, %v85
  %v87 = vadd.f32 %v86, 1e-07
  %v88 = vmul.f32 %v77, %v87
  %v89 = vlog2.pop %v88
  %v90 = vmul.f32 %v89, 0.6931472
  %v91 = vsub.f32 %v83, %v90
  %v92 = vmul.f32 %v80, 2.0
  %vm93 = vcmask 7168
  %94 = vst.msk [vmem:[%s5] sm:$0xff] %vm93, %v92
  %95 = vst.msk [vmem:[%s6] sm:$0xff] %vm93, %v91
  // Predicated region
  $region22: #{tpu_custom_call.1} parent=0 // pred_check
    _
  $region23: #{tpu_custom_call.1} parent=0 // pred_check_branch
    %97 = sbr.rel (0) target = $region25
  $region24: #{tpu_custom_call.1} parent=0 // pred_region
    _
  $region25: #{tpu_custom_call.1} parent=0 // pred_fallthru
    _
  // Predicated region
  $region26: #{tpu_custom_call.1} parent=0 // pred_check
    _
  $region27: #{tpu_custom_call.1} parent=0 // pred_check_branch
    %99 = sbr.rel (0) target = $region29
  $region28: #{tpu_custom_call.1} parent=0 // pred_region
    _
  $region29: #{tpu_custom_call.1} parent=0 // pred_fallthru
    _
  // Predicated region
  $region30: #{tpu_custom_call.1} parent=0 // pred_check
    _
  $region31: #{tpu_custom_call.1} parent=0 // pred_check_branch
    %101 = sbr.rel (0) target = $region33
  $region32: #{tpu_custom_call.1} parent=0 // pred_region
    _
  $region33: #{tpu_custom_call.1} parent=0 // pred_fallthru
    _
  // Predicated region
  $region34: #{tpu_custom_call.1} parent=0 // pred_check
    _
  $region35: #{tpu_custom_call.1} parent=0 // pred_check_branch
    %103 = sbr.rel (0) target = $region37
  $region36: #{tpu_custom_call.1} parent=0 // pred_region
    _
  $region37: #{tpu_custom_call.1} parent=0 // pred_fallthru
    _

</llo_original>
